<compile_context>
chip_gen: v7x
topology: tpu7x:2x2x1
jax: 0.10.0
libtpu: 0.0.40
codegen_flags: <defaults>
</compile_context>

<pallas_src>
import functools

import jax
import jax.numpy as jnp
from jax.experimental import pallas as pl
from jax.experimental.pallas import tpu as pltpu


def _num_groups(channels):
    # matches normalize(): 32 groups if channels > 32 else 1
    return 32 if channels > 32 else 1


# -----------------------------------------------------------------------------
# GroupNorm + swish  (tiled two-pass: stats, then normalize+swish)
# -----------------------------------------------------------------------------
def _gn_stats_kernel(x_ref, sum_ref, sq_ref, *, total_rows, tile_rows, need_mask):
    t = pl.program_id(1)

    @pl.when(t == 0)
    def _():
        sum_ref[...] = jnp.zeros_like(sum_ref)
        sq_ref[...] = jnp.zeros_like(sq_ref)

    x = x_ref[0].astype(jnp.float32)                       # (TL, C)
    if need_mask:  # ragged last tile: zero out the out-of-range rows
        rows = jax.lax.broadcasted_iota(jnp.int32, (tile_rows, 1), 0) + t * tile_rows
        x = jnp.where(rows < total_rows, x, 0.0)
    sum_ref[0] += jnp.sum(x, axis=0, keepdims=True)        # (1, C), f32 accum
    sq_ref[0] += jnp.sum(x * x, axis=0, keepdims=True)


def _gn_apply_kernel(x_ref, scale_ref, shift_ref, o_ref):
    x = x_ref[0].astype(jnp.float32)                       # (TL, C)
    y = x * scale_ref[0] + shift_ref[0]                    # (1, C) lane-dense bcast
    # swish(y) = y * sigmoid(y) = y / (1 + exp(-y))
    o_ref[0] = (y / (1.0 + jnp.exp(-y))).astype(o_ref.dtype)


def group_norm_swish(x, gamma, beta, num_groups, *, eps=1e-6, tile_rows=2048):
    """x: (N, D, L, C) channels-last.  Returns swish(GroupNorm(x)), same shape."""
    N, D, L, C = x.shape
    G = num_groups
    Cg = C // G
    LL = D * L
    xf = x.reshape(N, LL, C)

    if LL <= tile_rows:
        TL = LL
    else:
        TL = max(8, (tile_rows // 8) * 8)                  # keep sublane-aligned
    nt = pl.cdiv(LL, TL)
    need_mask = (LL % TL) != 0

    sums, sqs = pl.pallas_call(
        functools.partial(_gn_stats_kernel, total_rows=LL, tile_rows=TL,
                          need_mask=need_mask),
        out_shape=(jax.ShapeDtypeStruct((N, 1, C), jnp.float32),
                   jax.ShapeDtypeStruct((N, 1, C), jnp.float32)),
        grid=(N, nt),
        in_specs=[pl.BlockSpec((1, TL, C), lambda n, t: (n, t, 0))],
        out_specs=(pl.BlockSpec((1, 1, C), lambda n, t: (n, 0, 0)),
                   pl.BlockSpec((1, 1, C), lambda n, t: (n, 0, 0))),
        compiler_params=pltpu.CompilerParams(
            dimension_semantics=("parallel", "arbitrary")),
    )(xf)

    # Tiny per-(sample, group) statistics: plain JAX on (N, G) arrays.
    cnt = jnp.float32(Cg * LL)
    gsum = sums.reshape(N, G, Cg).sum(axis=2)
    gsq = sqs.reshape(N, G, Cg).sum(axis=2)
    mean = gsum / cnt
    # single-pass form; accumulation was f32, clamp tiny negative variance
    var = jnp.maximum(gsq / cnt - mean * mean, 0.0)
    inv = jax.lax.rsqrt(var + jnp.float32(eps))
    mean_c = jnp.repeat(mean, Cg, axis=1)                  # (N, C)
    inv_c = jnp.repeat(inv, Cg, axis=1)
    g = gamma.astype(jnp.float32).reshape(1, C)
    b = beta.astype(jnp.float32).reshape(1, C)
    scale = (inv_c * g).reshape(N, 1, C)
    shift = (b - mean_c * inv_c * g).reshape(N, 1, C)

    out = pl.pallas_call(
        _gn_apply_kernel,
        out_shape=jax.ShapeDtypeStruct((N, LL, C), x.dtype),
        grid=(N, nt),
        in_specs=[pl.BlockSpec((1, TL, C), lambda n, t: (n, t, 0)),
                  pl.BlockSpec((1, 1, C), lambda n, t: (n, 0, 0)),
                  pl.BlockSpec((1, 1, C), lambda n, t: (n, 0, 0))],
        out_specs=pl.BlockSpec((1, TL, C), lambda n, t: (n, t, 0)),
        compiler_params=pltpu.CompilerParams(
            dimension_semantics=("parallel", "parallel")),
    )(xf, scale, shift)
    return out.reshape(N, D, L, C)


# -----------------------------------------------------------------------------
# Conv3d 3x3x3 (stride 1, pad 1) with fused bias / residual / 1x1 shortcut
# -----------------------------------------------------------------------------
def _conv3d_kernel(x0_ref, x1_ref, x2_ref, w_ref, b_ref, *rest, W, res_mode):
    if res_mode == "none":
        (o_ref,) = rest
    elif res_mode == "add":
        res_ref, o_ref = rest
    else:  # "project": residual goes through the fused 1x1 conv_out
        res_ref, wp_ref, bp_ref, o_ref = rest

    L = o_ref.shape[2]
    Cout = o_ref.shape[3]
    P = W + 1                                              # flat-plane zero pad

    # Column-validity masks: tap kw=0 reads column w-1, tap kw=2 reads w+1.
    col = jax.lax.broadcasted_iota(jnp.int32, (L, 1), 0) % W
    mask_l = col >= 1
    mask_r = col <= W - 2

    acc = jnp.zeros((L, Cout), dtype=jnp.float32)
    x_refs = (x0_ref, x1_ref, x2_ref)
    for kd in range(3):
        for kh in range(3):
            for kw in range(3):
                start = P + (kh - 1) * W + (kw - 1)        # static flat shift
                win = x_refs[kd][0, 0, start:start + L, :].astype(jnp.float32)
                if kw == 0:
                    win = jnp.where(mask_l, win, 0.0)
                elif kw == 2:
                    win = jnp.where(mask_r, win, 0.0)
                tap = w_ref[(kd * 3 + kh) * 3 + kw].astype(jnp.float32)  # (Cin, Cout)
                acc = acc + jnp.dot(win, tap, preferred_element_type=jnp.float32)

    acc = acc + b_ref[...].astype(jnp.float32)             # (1, Cout) broadcast
    if res_mode == "add":
        acc = acc + res_ref[0, 0].astype(jnp.float32)
    elif res_mode == "project":
        r = res_ref[0, 0].astype(jnp.float32)              # (L, Cres)
        acc = acc + jnp.dot(r, wp_ref[...].astype(jnp.float32),
                            preferred_element_type=jnp.float32)
        acc = acc + bp_ref[...].astype(jnp.float32)
    o_ref[0, 0] = acc.astype(o_ref.dtype)


def conv3d_3x3(x, w, b, *, W, residual=None, residual_proj=None):
    """3x3x3 conv, stride 1, pad 1, on channels-last flattened-plane input.

    x: (N, D, L, Cin) with L = H*W.    w: PyTorch layout (Cout, Cin, 3, 3, 3).
    residual:      optional (N, D, L, *) tensor added to the output.
    residual_proj: optional (w_1x1, b_1x1) applied to `residual` (fused conv_out).
    """
    N, D, L, Cin = x.shape
    Cout = w.shape[0]
    P = W + 1
    xp = jnp.pad(x, ((0, 0), (1, 1), (P, P), (0, 0)))      # depth + flat-plane pad
    Lp = L + 2 * P
    wt = jnp.transpose(w, (2, 3, 4, 1, 0)).reshape(27, Cin, Cout).astype(x.dtype)
    bt = b.reshape(1, Cout).astype(jnp.float32)

    in_specs = [
        pl.BlockSpec((1, 1, Lp, Cin), lambda n, d: (n, d, 0, 0)),      # depth d-1
        pl.BlockSpec((1, 1, Lp, Cin), lambda n, d: (n, d + 1, 0, 0)),  # depth d
        pl.BlockSpec((1, 1, Lp, Cin), lambda n, d: (n, d + 2, 0, 0)),  # depth d+1
        pl.BlockSpec((27, Cin, Cout), lambda n, d: (0, 0, 0)),
        pl.BlockSpec((1, Cout), lambda n, d: (0, 0)),
    ]
    args = [xp, xp, xp, wt, bt]

    if residual is None:
        res_mode = "none"
    elif residual_proj is None:
        res_mode = "add"
        in_specs.append(pl.BlockSpec((1, 1, L, residual.shape[-1]),
                                     lambda n, d: (n, d, 0, 0)))
        args.append(residual)
    else:
        res_mode = "project"
        wp, bp = residual_proj
        Cres = residual.shape[-1]
        in_specs += [
            pl.BlockSpec((1, 1, L, Cres), lambda n, d: (n, d, 0, 0)),
            pl.BlockSpec((Cres, Cout), lambda n, d: (0, 0)),
            pl.BlockSpec((1, Cout), lambda n, d: (0, 0)),
        ]
        args += [residual,
                 jnp.transpose(wp.reshape(Cout, Cres)).astype(x.dtype),
                 bp.reshape(1, Cout).astype(jnp.float32)]

    return pl.pallas_call(
        functools.partial(_conv3d_kernel, W=W, res_mode=res_mode),
        out_shape=jax.ShapeDtypeStruct((N, D, L, Cout), x.dtype),
        grid=(N, D),
        in_specs=in_specs,
        out_specs=pl.BlockSpec((1, 1, L, Cout), lambda n, d: (n, d, 0, 0)),
        compiler_params=pltpu.CompilerParams(
            dimension_semantics=("parallel", "parallel")),
    )(*args)


# -----------------------------------------------------------------------------
# Full ResBlock3D forward
# -----------------------------------------------------------------------------
def res_block_3d(x, params, *, eps=1e-6):
    """x: (N, Cin, D, H, W) (PyTorch NCDHW).  Returns (N, Cout, D, H, W)."""
    N, Cin, D, H, W = x.shape
    Cout = params["conv1_w"].shape[0]

    # channels-last with the (H, W) plane flattened: (N, D, H*W, C)
    xl = jnp.transpose(x, (0, 2, 3, 4, 1)).reshape(N, D, H * W, Cin)

    h = group_norm_swish(xl, params["norm1_g"], params["norm1_b"],
                         _num_groups(Cin), eps=eps)
    h = conv3d_3x3(h, params["conv1_w"], params["conv1_b"], W=W)
    h = group_norm_swish(h, params["norm2_g"], params["norm2_b"],
                         _num_groups(Cout), eps=eps)
    if Cin != Cout:
        out = conv3d_3x3(h, params["conv2_w"], params["conv2_b"], W=W,
                         residual=xl,
                         residual_proj=(params["conv_out_w"], params["conv_out_b"]))
    else:
        out = conv3d_3x3(h, params["conv2_w"], params["conv2_b"], W=W,
                         residual=xl)
    return jnp.transpose(out.reshape(N, D, H, W, Cout), (0, 4, 1, 2, 3))


# -----------------------------------------------------------------------------
# Pure-JAX reference (mirrors the PyTorch module)
# -----------------------------------------------------------------------------
def _ref_group_norm(x, gamma, beta, num_groups, eps):
    N, C = x.shape[:2]
    xf = x.astype(jnp.float32).reshape(N, num_groups, -1)
    mean = xf.mean(axis=2, keepdims=True)
    var = ((xf - mean) ** 2).mean(axis=2, keepdims=True)   # biased, like PyTorch
    xn = ((xf - mean) / jnp.sqrt(var + eps)).reshape(x.shape)
    shape = (1, C) + (1,) * (x.ndim - 2)
    return xn * gamma.reshape(shape) + beta.reshape(shape)


def _ref_conv3d(x, w, b, padding):
    out = jax.lax.conv_general_dilated(
        x.astype(jnp.float32), w.astype(jnp.float32),
        window_strides=(1, 1, 1), padding=padding,
        dimension_numbers=("NCDHW", "OIDHW", "NCDHW"))
    return out + b.reshape(1, -1, 1, 1, 1)


def _ref_res_block_3d(x, params, eps=1e-6):
    Cin = x.shape[1]
    Cout = params["conv1_w"].shape[0]
    h = _ref_group_norm(x, params["norm1_g"], params["norm1_b"], _num_groups(Cin), eps)
    h = h * jax.nn.sigmoid(h)
    h = _ref_conv3d(h, params["conv1_w"], params["conv1_b"], [(1, 1)] * 3)
    h = _ref_group_norm(h, params["norm2_g"], params["norm2_b"], _num_groups(Cout), eps)
    h = h * jax.nn.sigmoid(h)
    h = _ref_conv3d(h, params["conv2_w"], params["conv2_b"], [(1, 1)] * 3)
    x_in = x.astype(jnp.float32)
    if Cin != Cout:
        x_in = _ref_conv3d(x, params["conv_out_w"], params["conv_out_b"], [(0, 0)] * 3)
    return h + x_in


if __name__ == "__main__":
    key = jax.random.PRNGKey(0)

    def make_params(k, cin, cout):
        ks = jax.random.split(k, 10)
        p = {
            "norm1_g": 1.0 + 0.1 * jax.random.normal(ks[0], (cin,), jnp.float32),
            "norm1_b": 0.1 * jax.random.normal(ks[1], (cin,), jnp.float32),
            "conv1_w": 0.1 * jax.random.normal(ks[2], (cout, cin, 3, 3, 3), jnp.float32),
            "conv1_b": 0.1 * jax.random.normal(ks[3], (cout,), jnp.float32),
            "norm2_g": 1.0 + 0.1 * jax.random.normal(ks[4], (cout,), jnp.float32),
            "norm2_b": 0.1 * jax.random.normal(ks[5], (cout,), jnp.float32),
            "conv2_w": 0.1 * jax.random.normal(ks[6], (cout, cout, 3, 3, 3), jnp.float32),
            "conv2_b": 0.1 * jax.random.normal(ks[7], (cout,), jnp.float32),
        }
        if cin != cout:
            p["conv_out_w"] = 0.1 * jax.random.normal(ks[8], (cout, cin, 1, 1, 1), jnp.float32)
            p["conv_out_b"] = 0.1 * jax.random.normal(ks[9], (cout,), jnp.float32)
        return p

    N, D, H, W = 2, 4, 8, 8
    k0, k1, k2, k3 = jax.random.split(key, 4)

    # Case 1: in_channels != out_channels (exercises the fused 1x1 conv_out shortcut)
    Cin, Cout = 4, 8
    x = jax.random.normal(k0, (N, Cin, D, H, W), jnp.float32)
    params = make_params(k1, Cin, Cout)
    out = jax.block_until_ready(res_block_3d(x, params))
    ref = _ref_res_block_3d(x, params)
    assert out.shape == (N, Cout, D, H, W) and out.dtype == x.dtype
    assert jnp.allclose(out, ref, atol=3e-2, rtol=3e-2), \
        f"case1 max_err={float(jnp.max(jnp.abs(out - ref)))}"

    # Case 2: in_channels == out_channels (identity residual path)
    Cin2 = Cout2 = 4
    x2 = jax.random.normal(k2, (N, Cin2, D, H, W), jnp.float32)
    params2 = make_params(k3, Cin2, Cout2)
    out2 = jax.block_until_ready(res_block_3d(x2, params2))
    ref2 = _ref_res_block_3d(x2, params2)
    assert jnp.allclose(out2, ref2, atol=3e-2, rtol=3e-2), \
        f"case2 max_err={float(jnp.max(jnp.abs(out2 - ref2)))}"

    print("KERNEL_OK")
</pallas_src>

<mosaic_0001>
module attributes {stable_mosaic.version = 11 : i64} {
  func.func @_gn_stats_kernel(%arg0: i32, %arg1: i32, %arg2: memref<1x256x4xf32, #tpu.memory_space<vmem>>, %arg3: memref<1x1x4xf32, #tpu.memory_space<vmem>>, %arg4: memref<1x1x4xf32, #tpu.memory_space<vmem>>) attributes {dimension_semantics = [#tpu.dimension_semantics<parallel>, #tpu.dimension_semantics<arbitrary>], iteration_bounds = array<i64: 2, 1>, scalar_prefetch = 0 : i64, scratch_operands = 0 : i64, tpu.core_type = #tpu.core_type<tc>, window_params = [{transform_indices = @transform_0, window_bounds = array<i64: 1, 256, 4>}, {transform_indices = @transform_1, window_bounds = array<i64: 1, 1, 4>}, {transform_indices = @transform_2, window_bounds = array<i64: 1, 1, 4>}]} {
    %c0_i32 = arith.constant 0 : i32
    %0 = arith.cmpi eq, %arg1, %c0_i32 : i32
    %1 = arith.extui %0 : i1 to i32
    %c0_i32_0 = arith.constant 0 : i32
    %2 = arith.cmpi ne, %1, %c0_i32_0 : i32
    scf.if %2 {
      %cst_16 = arith.constant 0.000000e+00 : f32
      %22 = vector.broadcast %cst_16 : f32 to vector<1x1x4xf32>
      %c0_17 = arith.constant 0 : index
      %c0_18 = arith.constant 0 : index
      %c0_19 = arith.constant 0 : index
      %23 = vector.load %arg3[%c0_17, %c0_18, %c0_19] : memref<1x1x4xf32, #tpu.memory_space<vmem>>, vector<1x1x4xf32>
      tpu.vector_store %arg3[%c0_17, %c0_18, %c0_19], %22 {strides = array<i32>} : memref<1x1x4xf32, #tpu.memory_space<vmem>>, vector<1x1x4xf32>,
      %cst_20 = arith.constant 0.000000e+00 : f32
      %24 = vector.broadcast %cst_20 : f32 to vector<1x1x4xf32>
      %c0_21 = arith.constant 0 : index
      %c0_22 = arith.constant 0 : index
      %c0_23 = arith.constant 0 : index
      %25 = vector.load %arg4[%c0_21, %c0_22, %c0_23] : memref<1x1x4xf32, #tpu.memory_space<vmem>>, vector<1x1x4xf32>
      tpu.vector_store %arg4[%c0_21, %c0_22, %c0_23], %24 {strides = array<i32>} : memref<1x1x4xf32, #tpu.memory_space<vmem>>, vector<1x1x4xf32>,
    } else {
    }
    %c0 = arith.constant 0 : index
    %c0_1 = arith.constant 0 : index
    %c0_2 = arith.constant 0 : index
    %3 = vector.load %arg2[%c0, %c0_1, %c0_2] : memref<1x256x4xf32, #tpu.memory_space<vmem>>, vector<1x256x4xf32>
    %4 = vector.shape_cast %3 : vector<1x256x4xf32> to vector<256x4xf32>
    %c0_3 = arith.constant 0 : index
    %c0_4 = arith.constant 0 : index
    %c0_5 = arith.constant 0 : index
    %5 = vector.load %arg3[%c0_3, %c0_4, %c0_5] : memref<1x1x4xf32, #tpu.memory_space<vmem>>, vector<1x1x4xf32>
    %6 = vector.shape_cast %5 : vector<1x1x4xf32> to vector<1x4xf32>
    %cst = arith.constant dense<0.000000e+00> : vector<4xf32>
    %7 = vector.multi_reduction <add>, %4, %cst [0] : vector<256x4xf32> to vector<4xf32>
    %8 = vector.shape_cast %7 : vector<4xf32> to vector<1x4xf32>
    %9 = arith.addf %6, %8 : vector<1x4xf32>
    %c0_6 = arith.constant 0 : index
    %c0_7 = arith.constant 0 : index
    %c0_8 = arith.constant 0 : index
    %10 = vector.load %arg3[%c0_6, %c0_7, %c0_8] : memref<1x1x4xf32, #tpu.memory_space<vmem>>, vector<1x1x4xf32>
    %11 = vector.shape_cast %10 : vector<1x1x4xf32> to vector<1x4xf32>
    %12 = vector.shape_cast %9 : vector<1x4xf32> to vector<1x1x4xf32>
    tpu.vector_store %arg3[%c0_6, %c0_7, %c0_8], %12 {strides = array<i32>} : memref<1x1x4xf32, #tpu.memory_space<vmem>>, vector<1x1x4xf32>,
    %c0_9 = arith.constant 0 : index
    %c0_10 = arith.constant 0 : index
    %c0_11 = arith.constant 0 : index
    %13 = vector.load %arg4[%c0_9, %c0_10, %c0_11] : memref<1x1x4xf32, #tpu.memory_space<vmem>>, vector<1x1x4xf32>
    %14 = vector.shape_cast %13 : vector<1x1x4xf32> to vector<1x4xf32>
    %15 = arith.mulf %4, %4 : vector<256x4xf32>
    %cst_12 = arith.constant dense<0.000000e+00> : vector<4xf32>
    %16 = vector.multi_reduction <add>, %15, %cst_12 [0] : vector<256x4xf32> to vector<4xf32>
    %17 = vector.shape_cast %16 : vector<4xf32> to vector<1x4xf32>
    %18 = arith.addf %14, %17 : vector<1x4xf32>
    %c0_13 = arith.constant 0 : index
    %c0_14 = arith.constant 0 : index
    %c0_15 = arith.constant 0 : index
    %19 = vector.load %arg4[%c0_13, %c0_14, %c0_15] : memref<1x1x4xf32, #tpu.memory_space<vmem>>, vector<1x1x4xf32>
    %20 = vector.shape_cast %19 : vector<1x1x4xf32> to vector<1x4xf32>
    %21 = vector.shape_cast %18 : vector<1x4xf32> to vector<1x1x4xf32>
    tpu.vector_store %arg4[%c0_13, %c0_14, %c0_15], %21 {strides = array<i32>} : memref<1x1x4xf32, #tpu.memory_space<vmem>>, vector<1x1x4xf32>,
    return
  }
  func.func @transform_0(%arg0: i32, %arg1: i32) -> (i32, i32, i32) {
    %c0_i32 = arith.constant 0 : i32
    %c0_i32_0 = arith.constant 0 : i32
    return %arg0, %arg1, %c0_i32 : i32, i32, i32
  }
  func.func @transform_1(%arg0: i32, %arg1: i32) -> (i32, i32, i32) {
    %c0_i32 = arith.constant 0 : i32
    %c0_i32_0 = arith.constant 0 : i32
    %c0_i32_1 = arith.constant 0 : i32
    return %arg0, %c0_i32, %c0_i32_0 : i32, i32, i32
  }
  func.func @transform_2(%arg0: i32, %arg1: i32) -> (i32, i32, i32) {
    %c0_i32 = arith.constant 0 : i32
    %c0_i32_0 = arith.constant 0 : i32
    %c0_i32_1 = arith.constant 0 : i32
    return %arg0, %c0_i32, %c0_i32_0 : i32, i32, i32
  }
}

</mosaic_0001>

<llo_original>
// kernel: tpu_custom_call.1
$region0: #{tpu_custom_call.1}
  #allocation0 [shape = 'u32[]', space=smem, size = 0x4, offset = 0x4, fixed_abs, tag = 'smem constant byte address 0x4 - core index']
  #allocation1 [shape = 'u32[144,128]{1,0:T(1,128)}', space=vmem, size = 0x12000, scoped, tag = 'internal scratch']
  %s0 = inlined_call_operand.vmem [shape: f32[2,256,4], index: 0, kind: input, shape index: {}]
  %s1 = inlined_call_operand.hbm [shape: f32[2,1,4], index: 1, kind: output, shape index: {0}]
  %s2 = inlined_call_operand.hbm [shape: f32[2,1,4], index: 2, kind: output, shape index: {1}]
  %3 = xla_tuple %s1, %s2
  %s4 = sld [smem:[#allocation0]]
  $region49: #{tpu_custom_call.1} parent=0
    _
  %s6 = ssub.s32 1, %s4
  %s7 = scalar_select 0, %s6, %s4
  $region1: #{tpu_custom_call.1} parent=0
    #allocation2 [shape = 'u8[1024]{0}', space=vmem, size = 0x400, scoped, tag = 'output window, operand 0']
    #allocation3 [shape = 's32[2]{0}', space=sflag, size = 0x8, scoped, tag = 'scoped memory for tpu_custom_call.1']
    #allocation4 [shape = 'u8[1024]{0}', space=vmem, size = 0x400, scoped, tag = 'output window, operand 1']
    #allocation5 [shape = 's32[2]{0}', space=sflag, size = 0x8, scoped, tag = 'scoped memory for tpu_custom_call.1']
    %8 = vsyncpa [#allocation3], 0
    %s9 = scalar_lea.sflag [#allocation3], 1
    %10 = vsyncpa %s9, 0
    %11 = vsyncpa [#allocation5], 0
    %s12 = scalar_lea.sflag [#allocation5], 1
    %13 = vsyncpa %s12, 0
    loop: start=0, step=1, limit=4
    $region2: #{tpu_custom_call.1} parent=1 // loop_pre_header
      _
    $region3: #{tpu_custom_call.1} parent=1 // loop_header
      %s15 = sphi 0, %s19
      %p16 = scmp.ge.s32.totalorder %s15, 4
      %s22 = sphi 0, %s34
      %s23 = sphi 0, %s30
      %s24 = sphi 0, %s22
      %s25 = sphi 0, %s23
      %s26 = sphi 0, %s24
      %s27 = sphi 0, %s25
      %s39 = sphi 0, %s41
      %s42 = sphi 0, %s39
      %s43 = sphi 0, %s42
      %s59 = sphi 0, %s43
      %s65 = sphi 0, %s67
      %s68 = sphi 0, %s65
      %s69 = sphi 0, %s68
      %s85 = sphi 0, %s69
      %s91 = sphi 0, %s93
      %s94 = sphi 0, %s91
      %s95 = sphi 0, %s94
      %s111 = sphi 0, %s95
    $region4: #{tpu_custom_call.1} parent=1 // loop_header_branch
      %18 = sbr.rel (%p16) target = $region8
    $region5: #{tpu_custom_call.1} parent=1 // loop_body
      %s20 = ssub.s32 %s15, 1
      %s21 = ssub.s32 %s15, 2
      %s28 = sadd.s32 1, %s23
      %p29 = scmp.ge.s32.totalorder %s28, 1
      %s30 = scalar_select %p29, 0, %s28
      %s31 = sadd.s32 1, %s22
      %s32 = scalar_select %p29, %s31, %s22
      %p33 = scmp.ge.s32.totalorder %s32, 2
      %s34 = scalar_select %p33, 0, %s32
      %s35 = ssub.s32 %s22, %s34
      %s36 = ssub.s32 %s23, %s30
      %s37 = sor.u32 %s35, %s36
      %p38 = scmp.eq.s32.totalorder %s37, 0
      %s40 = sadd.s32 %s39, 1
      %s41 = scalar_select %p38, %s39, %s40
      %p44 = pneg %p38
      %p45 = scmp.eq.s32.totalorder %s15, 1
      %p46 = por %p44, %p45
      %p47 = scmp.ne.s32.totalorder %s39, %s42
      %p48 = scmp.eq.s32.totalorder %s15, 0
      %p49 = por %p47, %p48
      %p50 = scmp.ne.s32.totalorder %s39, %s42
      %p51 = scmp.eq.s32.totalorder %s20, 1
      %p52 = por %p50, %p51
      %p53 = scmp.ne.s32.totalorder %s42, %s43
      %p54 = scmp.eq.s32.totalorder %s20, 0
      %p55 = por %p53, %p54
      %p56 = scmp.ne.s32.totalorder %s42, %s43
      %p57 = scmp.eq.s32.totalorder %s21, 1
      %p58 = por %p56, %p57
      %p60 = scmp.ne.s32.totalorder %s43, %s59
      %p61 = scmp.eq.s32.totalorder %s21, 0
      %p62 = por %p60, %p61
      %s63 = ssub.s32 %s22, %s34
      %p64 = scmp.eq.s32.totalorder %s63, 0
      %s66 = sadd.s32 %s65, 1
      %s67 = scalar_select %p64, %s65, %s66
      %p70 = pneg %p64
      %p71 = scmp.eq.s32.totalorder %s15, 1
      %p72 = por %p70, %p71
      %p73 = scmp.ne.s32.totalorder %s65, %s68
      %p74 = scmp.eq.s32.totalorder %s15, 0
      %p75 = por %p73, %p74
      %p76 = scmp.ne.s32.totalorder %s65, %s68
      %p77 = scmp.eq.s32.totalorder %s20, 1
      %p78 = por %p76, %p77
      %p79 = scmp.ne.s32.totalorder %s68, %s69
      %p80 = scmp.eq.s32.totalorder %s20, 0
      %p81 = por %p79, %p80
      %p82 = scmp.ne.s32.totalorder %s68, %s69
      %p83 = scmp.eq.s32.totalorder %s21, 1
      %p84 = por %p82, %p83
      %p86 = scmp.ne.s32.totalorder %s69, %s85
      %p87 = scmp.eq.s32.totalorder %s21, 0
      %p88 = por %p86, %p87
      %s89 = ssub.s32 %s22, %s34
      %p90 = scmp.eq.s32.totalorder %s89, 0
      %s92 = sadd.s32 %s91, 1
      %s93 = scalar_select %p90, %s91, %s92
      %p96 = pneg %p90
      %p97 = scmp.eq.s32.totalorder %s15, 1
      %p98 = por %p96, %p97
      %p99 = scmp.ne.s32.totalorder %s91, %s94
      %p100 = scmp.eq.s32.totalorder %s15, 0
      %p101 = por %p99, %p100
      %p102 = scmp.ne.s32.totalorder %s91, %s94
      %p103 = scmp.eq.s32.totalorder %s20, 1
      %p104 = por %p102, %p103
      %p105 = scmp.ne.s32.totalorder %s94, %s95
      %p106 = scmp.eq.s32.totalorder %s20, 0
      %p107 = por %p105, %p106
      %p108 = scmp.ne.s32.totalorder %s94, %s95
      %p109 = scmp.eq.s32.totalorder %s21, 1
      %p110 = por %p108, %p109
      %p112 = scmp.ne.s32.totalorder %s95, %s111
      %p113 = scmp.eq.s32.totalorder %s21, 0
      %p114 = por %p112, %p113
      %p115 = scmp.le.s32.totalorder 1, %s15
      %p116 = scmp.lt.s32.totalorder %s15, 3
      %p117 = pnand %p115, %p116
      %p118 = pneg %p117
      // Predicated region
      $region9: #{tpu_custom_call.1} parent=5 // pred_check
        _
      $region10: #{tpu_custom_call.1} parent=5 // pred_check_branch
        %120 = sbr.rel (%p117) target = $region12
      $region11: #{tpu_custom_call.1} parent=5 // pred_region
        %s121 = ssub.s32 %s15, 1
      $region12: #{tpu_custom_call.1} parent=5 // pred_fallthru
        _
      %p122 = scmp.lt.s32.totalorder %s15, 2
      // Predicated region
      $region13: #{tpu_custom_call.1} parent=5 // pred_check
        %p123 = pneg %p122
      $region14: #{tpu_custom_call.1} parent=5 // pred_check_branch
        %125 = sbr.rel (%p123) target = $region16
      $region15: #{tpu_custom_call.1} parent=5 // pred_region
        // Predicated region
        $region17: #{tpu_custom_call.1} parent=15 // pred_check
          %p126 = pneg %p49
        $region18: #{tpu_custom_call.1} parent=15 // pred_check_branch
          %128 = sbr.rel (%p126) target = $region20
        $region19: #{tpu_custom_call.1} parent=15 // pred_region
          %s129 = smul.u32 32, %s23
          %p130 = scmp.lt.s32.totalorder %s22, 1
          %s131 = scalar_select %p130, %s22, 1
          %p132 = scmp.lt.s32.totalorder %s129, 31
          %s133 = scalar_select %p132, %s129, 31
          %s134 = smul.addr %s131, 32
          %s135 = sadd.s32 %s133, %s134
          %s136 = smul.addr %s135, 8
          %s137 = scalar_lea.vmem %s0, %s136
          %s138 = smul.u32 32, %s23
        $region20: #{tpu_custom_call.1} parent=15 // pred_fallthru
          _
      $region16: #{tpu_custom_call.1} parent=5 // pred_fallthru
        _
      %p139 = scmp.le.s32.totalorder 1, %s15
      %p140 = scmp.lt.s32.totalorder %s15, 3
      %p141 = pnand %p139, %p140
      %p142 = pneg %p141
      // Predicated region
      $region21: #{tpu_custom_call.1} parent=5 // pred_check
        _
      $region22: #{tpu_custom_call.1} parent=5 // pred_check_branch
        %144 = sbr.rel (%p141) target = $region24
      $region23: #{tpu_custom_call.1} parent=5 // pred_region
        %s145 = ssub.s32 %s15, 1
        %s146 = smul.u32 32, %s25
        %p147 = scmp.lt.s32.totalorder %s24, 1
        %s148 = scalar_select %p147, %s24, 1
        %p149 = scmp.lt.s32.totalorder %s146, 31
        %s150 = scalar_select %p149, %s146, 31
        %s151 = smul.addr %s148, 32
        %s152 = sadd.s32 %s150, %s151
        %s153 = smul.addr %s152, 8
        %s154 = scalar_lea.vmem %s0, %s153
        %p155 = pneg %p55
        %p156 = pneg %p52
        %p157 = pneg %p81
        %p158 = pneg %p78
        %s159 = sand.u32 %s68, 1
        %s160 = scalar_lea.sflag [#allocation3], %s159
        %s161 = sand.u32 %s68, 1
        %s162 = scalar_lea.vmem [#allocation2], %s161
        %p163 = pneg %p107
        %p164 = pneg %p104
        %s165 = sand.u32 %s94, 1
        %s166 = scalar_lea.sflag [#allocation5], %s165
        %s167 = sand.u32 %s94, 1
        %s168 = scalar_lea.vmem [#allocation4], %s167
        %s169 = smul.u32 32, %s25
        %p170 = scmp.lt.s32.totalorder %s24, 1
        %s171 = scalar_select %p170, %s24, 1
        %p172 = scmp.lt.s32.totalorder %s169, 31
        %s173 = scalar_select %p172, %s169, 31
        %s174 = smul.addr %s171, 32
        %s175 = sadd.s32 %s173, %s174
        %s176 = smul.addr %s175, 8
        %s177 = scalar_lea.vmem %s0, %s176
        %s178 = smul.u32 32, %s25
        %p179 = scmp.eq.s32.totalorder %s25, 0
        // Predicated region
        $region25: #{tpu_custom_call.1} parent=23 // pred_check
          %p180 = pneg %p179
        $region26: #{tpu_custom_call.1} parent=23 // pred_check_branch
          %182 = sbr.rel (%p180) target = $region28
        $region27: #{tpu_custom_call.1} parent=23 // pred_region
          %vm183 = vcmask 24576
          %184 = vst.msk [vmem:[%s162] sm:$0x1] %vm183, 0.0
          %185 = vst.msk [vmem:[%s168] sm:$0x1] %vm183, 0.0
        $region28: #{tpu_custom_call.1} parent=23 // pred_fallthru
          _
        %v186 = vld [vmem:[%s177] sm:$0xff]
        %v187 = vld [vmem:[%s177 + $0x8] sm:$0xff]
        %v188 = vld [vmem:[%s177 + $0x10] sm:$0xff]
        %v189 = vld [vmem:[%s177 + $0x18] sm:$0xff]
        %v190 = vld [vmem:[%s177 + $0x20] sm:$0xff]
        %v191 = vld [vmem:[%s177 + $0x28] sm:$0xff]
        %v192 = vld [vmem:[%s177 + $0x30] sm:$0xff]
        %v193 = vld [vmem:[%s177 + $0x38] sm:$0xff]
        %v194 = vld [vmem:[%s177 + $0x40] sm:$0xff]
        %v195 = vld [vmem:[%s177 + $0x48] sm:$0xff]
        %v196 = vld [vmem:[%s177 + $0x50] sm:$0xff]
        %v197 = vld [vmem:[%s177 + $0x58] sm:$0xff]
        %v198 = vld [vmem:[%s177 + $0x60] sm:$0xff]
        %v199 = vld [vmem:[%s177 + $0x68] sm:$0xff]
        %v200 = vld [vmem:[%s177 + $0x70] sm:$0xff]
        %v201 = vld [vmem:[%s177 + $0x78] sm:$0xff]
        %v202 = vld [vmem:[%s177 + $0x80] sm:$0xff]
        %v203 = vld [vmem:[%s177 + $0x88] sm:$0xff]
        %v204 = vld [vmem:[%s177 + $0x90] sm:$0xff]
        %v205 = vld [vmem:[%s177 + $0x98] sm:$0xff]
        %v206 = vld [vmem:[%s177 + $0xa0] sm:$0xff]
        %v207 = vld [vmem:[%s177 + $0xa8] sm:$0xff]
        %v208 = vld [vmem:[%s177 + $0xb0] sm:$0xff]
        %v209 = vld [vmem:[%s177 + $0xb8] sm:$0xff]
        %v210 = vld [vmem:[%s177 + $0xc0] sm:$0xff]
        %v211 = vld [vmem:[%s177 + $0xc8] sm:$0xff]
        %v212 = vld [vmem:[%s177 + $0xd0] sm:$0xff]
        %v213 = vld [vmem:[%s177 + $0xd8] sm:$0xff]
        %v214 = vld [vmem:[%s177 + $0xe0] sm:$0xff]
        %v215 = vld [vmem:[%s177 + $0xe8] sm:$0xff]
        %v216 = vld [vmem:[%s177 + $0xf0] sm:$0xff]
        %v217 = vld [vmem:[%s177 + $0xf8] sm:$0xff]
        %v218 = vld [vmem:[%s162] sm:$0x1]
        %vm219 = vcmask 31744
        %v220 = vsel %vm219, %v186, 0.0
        %v221 = vsel %vm219, %v187, 0.0
        %v222 = vadd.f32 %v220, %v221
        %v223 = vsel %vm219, %v188, 0.0
        %v224 = vadd.f32 %v222, %v223
        %v225 = vsel %vm219, %v189, 0.0
        %v226 = vadd.f32 %v224, %v225
        %v227 = vsel %vm219, %v190, 0.0
        %v228 = vadd.f32 %v226, %v227
        %v229 = vsel %vm219, %v191, 0.0
        %v230 = vadd.f32 %v228, %v229
        %v231 = vsel %vm219, %v192, 0.0
        %v232 = vadd.f32 %v230, %v231
        %v233 = vsel %vm219, %v193, 0.0
        %v234 = vadd.f32 %v232, %v233
        %v235 = vsel %vm219, %v194, 0.0
        %v236 = vadd.f32 %v234, %v235
        %v237 = vsel %vm219, %v195, 0.0
        %v238 = vadd.f32 %v236, %v237
        %v239 = vsel %vm219, %v196, 0.0
        %v240 = vadd.f32 %v238, %v239
        %v241 = vsel %vm219, %v197, 0.0
        %v242 = vadd.f32 %v240, %v241
        %v243 = vsel %vm219, %v198, 0.0
        %v244 = vadd.f32 %v242, %v243
        %v245 = vsel %vm219, %v199, 0.0
        %v246 = vadd.f32 %v244, %v245
        %v247 = vsel %vm219, %v200, 0.0
        %v248 = vadd.f32 %v246, %v247
        %v249 = vsel %vm219, %v201, 0.0
        %v250 = vadd.f32 %v248, %v249
        %v251 = vsel %vm219, %v202, 0.0
        %v252 = vadd.f32 %v250, %v251
        %v253 = vsel %vm219, %v203, 0.0
        %v254 = vadd.f32 %v252, %v253
        %v255 = vsel %vm219, %v204, 0.0
        %v256 = vadd.f32 %v254, %v255
        %v257 = vsel %vm219, %v205, 0.0
        %v258 = vadd.f32 %v256, %v257
        %v259 = vsel %vm219, %v206, 0.0
        %v260 = vadd.f32 %v258, %v259
        %v261 = vsel %vm219, %v207, 0.0
        %v262 = vadd.f32 %v260, %v261
        %v263 = vsel %vm219, %v208, 0.0
        %v264 = vadd.f32 %v262, %v263
        %v265 = vsel %vm219, %v209, 0.0
        %v266 = vadd.f32 %v264, %v265
        %v267 = vsel %vm219, %v210, 0.0
        %v268 = vadd.f32 %v266, %v267
        %v269 = vsel %vm219, %v211, 0.0
        %v270 = vadd.f32 %v268, %v269
        %v271 = vsel %vm219, %v212, 0.0
        %v272 = vadd.f32 %v270, %v271
        %v273 = vsel %vm219, %v213, 0.0
        %v274 = vadd.f32 %v272, %v273
        %v275 = vsel %vm219, %v214, 0.0
        %v276 = vadd.f32 %v274, %v275
        %v277 = vsel %vm219, %v215, 0.0
        %v278 = vadd.f32 %v276, %v277
        %v279 = vsel %vm219, %v216, 0.0
        %v280 = vadd.f32 %v278, %v279
        %v281 = vsel %vm219, %v217, 0.0
        %v282 = vadd.f32 %v280, %v281
        %v283 = vrot.slane %v282, 4
        %v284 = vadd.f32 %v282, %v283
        %v285 = vrot.slane %v284, 2
        %v286 = vadd.f32 %v284, %v285
        %v287 = vrot.slane %v286, 1
        %v288 = vadd.f32 %v286, %v287
        %v289 = vadd.f32 %v218, %v288
        %vm290 = vcmask 24576
        %291 = vst.msk [vmem:[%s162] sm:$0x1] %vm290, %v289
        %v292 = vld [vmem:[%s168] sm:$0x1]
        %v293 = vmul.f32 %v186, %v186
        %v294 = vmul.f32 %v187, %v187
        %v295 = vmul.f32 %v188, %v188
        %v296 = vmul.f32 %v189, %v189
        %v297 = vmul.f32 %v190, %v190
        %v298 = vmul.f32 %v191, %v191
        %v299 = vmul.f32 %v192, %v192
        %v300 = vmul.f32 %v193, %v193
        %v301 = vmul.f32 %v194, %v194
        %v302 = vmul.f32 %v195, %v195
        %v303 = vmul.f32 %v196, %v196
        %v304 = vmul.f32 %v197, %v197
        %v305 = vmul.f32 %v198, %v198
        %v306 = vmul.f32 %v199, %v199
        %v307 = vmul.f32 %v200, %v200
        %v308 = vmul.f32 %v201, %v201
        %v309 = vmul.f32 %v202, %v202
        %v310 = vmul.f32 %v203, %v203
        %v311 = vmul.f32 %v204, %v204
        %v312 = vmul.f32 %v205, %v205
        %v313 = vmul.f32 %v206, %v206
        %v314 = vmul.f32 %v207, %v207
        %v315 = vmul.f32 %v208, %v208
        %v316 = vmul.f32 %v209, %v209
        %v317 = vmul.f32 %v210, %v210
        %v318 = vmul.f32 %v211, %v211
        %v319 = vmul.f32 %v212, %v212
        %v320 = vmul.f32 %v213, %v213
        %v321 = vmul.f32 %v214, %v214
        %v322 = vmul.f32 %v215, %v215
        %v323 = vmul.f32 %v216, %v216
        %v324 = vmul.f32 %v217, %v217
        %v325 = vsel %vm219, %v293, 0.0
        %v326 = vsel %vm219, %v294, 0.0
        %v327 = vadd.f32 %v325, %v326
        %v328 = vsel %vm219, %v295, 0.0
        %v329 = vadd.f32 %v327, %v328
        %v330 = vsel %vm219, %v296, 0.0
        %v331 = vadd.f32 %v329, %v330
        %v332 = vsel %vm219, %v297, 0.0
        %v333 = vadd.f32 %v331, %v332
        %v334 = vsel %vm219, %v298, 0.0
        %v335 = vadd.f32 %v333, %v334
        %v336 = vsel %vm219, %v299, 0.0
        %v337 = vadd.f32 %v335, %v336
        %v338 = vsel %vm219, %v300, 0.0
        %v339 = vadd.f32 %v337, %v338
        %v340 = vsel %vm219, %v301, 0.0
        %v341 = vadd.f32 %v339, %v340
        %v342 = vsel %vm219, %v302, 0.0
        %v343 = vadd.f32 %v341, %v342
        %v344 = vsel %vm219, %v303, 0.0
        %v345 = vadd.f32 %v343, %v344
        %v346 = vsel %vm219, %v304, 0.0
        %v347 = vadd.f32 %v345, %v346
        %v348 = vsel %vm219, %v305, 0.0
        %v349 = vadd.f32 %v347, %v348
        %v350 = vsel %vm219, %v306, 0.0
        %v351 = vadd.f32 %v349, %v350
        %v352 = vsel %vm219, %v307, 0.0
        %v353 = vadd.f32 %v351, %v352
        %v354 = vsel %vm219, %v308, 0.0
        %v355 = vadd.f32 %v353, %v354
        %v356 = vsel %vm219, %v309, 0.0
        %v357 = vadd.f32 %v355, %v356
        %v358 = vsel %vm219, %v310, 0.0
        %v359 = vadd.f32 %v357, %v358
        %v360 = vsel %vm219, %v311, 0.0
        %v361 = vadd.f32 %v359, %v360
        %v362 = vsel %vm219, %v312, 0.0
        %v363 = vadd.f32 %v361, %v362
        %v364 = vsel %vm219, %v313, 0.0
        %v365 = vadd.f32 %v363, %v364
        %v366 = vsel %vm219, %v314, 0.0
        %v367 = vadd.f32 %v365, %v366
        %v368 = vsel %vm219, %v315, 0.0
        %v369 = vadd.f32 %v367, %v368
        %v370 = vsel %vm219, %v316, 0.0
        %v371 = vadd.f32 %v369, %v370
        %v372 = vsel %vm219, %v317, 0.0
        %v373 = vadd.f32 %v371, %v372
        %v374 = vsel %vm219, %v318, 0.0
        %v375 = vadd.f32 %v373, %v374
        %v376 = vsel %vm219, %v319, 0.0
        %v377 = vadd.f32 %v375, %v376
        %v378 = vsel %vm219, %v320, 0.0
        %v379 = vadd.f32 %v377, %v378
        %v380 = vsel %vm219, %v321, 0.0
        %v381 = vadd.f32 %v379, %v380
        %v382 = vsel %vm219, %v322, 0.0
        %v383 = vadd.f32 %v381, %v382
        %v384 = vsel %vm219, %v323, 0.0
        %v385 = vadd.f32 %v383, %v384
        %v386 = vsel %vm219, %v324, 0.0
        %v387 = vadd.f32 %v385, %v386
        %v388 = vrot.slane %v387, 4
        %v389 = vadd.f32 %v387, %v388
        %v390 = vrot.slane %v389, 2
        %v391 = vadd.f32 %v389, %v390
        %v392 = vrot.slane %v391, 1
        %v393 = vadd.f32 %v391, %v392
        %v394 = vadd.f32 %v292, %v393
        %395 = vst.msk [vmem:[%s168] sm:$0x1] %vm290, %v394
        %s396 = sand.u32 %s68, 1
        %s397 = scalar_lea.sflag [#allocation3], %s396
        %s398 = sand.u32 %s68, 1
        %s399 = scalar_lea.vmem [#allocation2], %s398
        %s400 = sand.u32 %s94, 1
        %s401 = scalar_lea.sflag [#allocation5], %s400
        %s402 = sand.u32 %s94, 1
        %s403 = scalar_lea.vmem [#allocation4], %s402
        // Predicated region
        $region29: #{tpu_custom_call.1} parent=23 // pred_check
          %p404 = pneg %p78
        $region30: #{tpu_custom_call.1} parent=23 // pred_check_branch
          %406 = sbr.rel (%p404) target = $region32
        $region31: #{tpu_custom_call.1} parent=23 // pred_region
          %s408 = ssub.s32 16, 16
          %409 = vsyncadd %s397, %s408
          %s410 = smul.addr %s24, 16
          %s411 = scalar_lea.hbm %s1, %s410
          %s413 = sshll.u32 %s399, 4
          %s414 = int_to_ptr.vmem [resolvable:$true] %s413
          %416 = dma.vmem_to_hbm [thread:$0]  %s414, 16, %s411, %s397
        $region32: #{tpu_custom_call.1} parent=23 // pred_fallthru
          _
        // Predicated region
        $region33: #{tpu_custom_call.1} parent=23 // pred_check
          %p417 = pneg %p104
        $region34: #{tpu_custom_call.1} parent=23 // pred_check_branch
          %419 = sbr.rel (%p417) target = $region36
        $region35: #{tpu_custom_call.1} parent=23 // pred_region
          %s421 = ssub.s32 16, 16
          %422 = vsyncadd %s401, %s421
          %s423 = smul.addr %s24, 16
          %s424 = scalar_lea.hbm %s2, %s423
          %s426 = sshll.u32 %s403, 4
          %s427 = int_to_ptr.vmem [resolvable:$true] %s426
          %429 = dma.vmem_to_hbm [thread:$0]  %s427, 16, %s424, %s401
        $region36: #{tpu_custom_call.1} parent=23 // pred_fallthru
          _
      $region24: #{tpu_custom_call.1} parent=5 // pred_fallthru
        _
      %p430 = scmp.le.s32.totalorder 2, %s15
      // Predicated region
      $region37: #{tpu_custom_call.1} parent=5 // pred_check
        %p431 = pneg %p430
      $region38: #{tpu_custom_call.1} parent=5 // pred_check_branch
        %433 = sbr.rel (%p431) target = $region40
      $region39: #{tpu_custom_call.1} parent=5 // pred_region
        %s434 = ssub.s32 %s15, 2
        // Predicated region
        $region41: #{tpu_custom_call.1} parent=39 // pred_check
          %p435 = pneg %p84
        $region42: #{tpu_custom_call.1} parent=39 // pred_check_branch
          %437 = sbr.rel (%p435) target = $region44
        $region43: #{tpu_custom_call.1} parent=39 // pred_region
          %s438 = sand.u32 %s69, 1
          %s439 = scalar_lea.sflag [#allocation3], %s438
          %s440 = sand.u32 %s69, 1
          %s441 = scalar_lea.vmem [#allocation2], %s440
          %442 = dma.done %s439, 16
        $region44: #{tpu_custom_call.1} parent=39 // pred_fallthru
          _
        // Predicated region
        $region45: #{tpu_custom_call.1} parent=39 // pred_check
          %p443 = pneg %p110
        $region46: #{tpu_custom_call.1} parent=39 // pred_check_branch
          %445 = sbr.rel (%p443) target = $region48
        $region47: #{tpu_custom_call.1} parent=39 // pred_region
          %s446 = sand.u32 %s95, 1
          %s447 = scalar_lea.sflag [#allocation5], %s446
          %s448 = sand.u32 %s95, 1
          %s449 = scalar_lea.vmem [#allocation4], %s448
          %450 = dma.done %s447, 16
        $region48: #{tpu_custom_call.1} parent=39 // pred_fallthru
          _
      $region40: #{tpu_custom_call.1} parent=5 // pred_fallthru
        _
    $region6: #{tpu_custom_call.1} parent=1 // loop_footer
      %s19 = sadd.s32 1, %s15
    $region7: #{tpu_custom_call.1} parent=1 // loop_footer_branch
      %14 = sbr.rel target = $region3
    $region8: #{tpu_custom_call.1} parent=1 // loop_exit
      _
    %451 = vsyncpa [#allocation3], 1
    %s452 = scalar_lea.sflag [#allocation3], 1
    %453 = vsyncpa %s452, 1
    %454 = vsyncpa [#allocation5], 1
    %s455 = scalar_lea.sflag [#allocation5], 1
    %456 = vsyncpa %s455, 1

</llo_original>
